<compile_context>
chip_gen: v7x
topology: tpu7x:2x2x1
jax: 0.10.0
libtpu: 0.0.40
codegen_flags: <defaults>
</compile_context>

<pallas_src>
from functools import partial

import jax
import jax.numpy as jnp
import numpy as np
from jax.experimental import pallas as pl
from jax.experimental.pallas import tpu as pltpu


# ----------------------------------------------------------------------------
# Kernels
# ----------------------------------------------------------------------------
def _agca_fused_kernel(x_ref, w1t_ref, a0_ref, a2_ref, w4t_ref, scal_ref, o_ref):
    """One grid step = bt whole images: pool -> channel attention -> gate."""
    x = x_ref[...]                                            # (bt, C_in, HW), input dtype
    w2 = scal_ref[0]
    w3 = scal_ref[1]

    # AdaptiveAvgPool2d(1): f32-accumulated spatial sum (1/HW is pre-folded
    # into w1t), no materialized f32 copy of the slab.
    p = jnp.sum(x, axis=-1, dtype=jnp.float32)                             # (bt, C_in)

    # conv1 (1x1, no bias): z = (p / HW) @ W1^T   (scale folded into w1t)
    z = jnp.dot(p, w1t_ref[...], preferred_element_type=jnp.float32)       # (bt, hide)

    # conv2 (Conv1d(1,1,k=1) == scalar) + softmax over the hidden axis
    logits = z * w2
    m = jnp.max(logits, axis=-1, keepdims=True)
    e = jnp.exp(logits - m)
    s = e / jnp.sum(e, axis=-1, keepdims=True)                             # (bt, hide)

    # y @ (A0 * A1 + A2)  ==  s * (z @ A0) + z @ A2
    t = s * jnp.dot(z, a0_ref[...], preferred_element_type=jnp.float32) \
        + jnp.dot(z, a2_ref[...], preferred_element_type=jnp.float32)      # (bt, hide)

    # conv3 (scalar) + ReLU
    u = jnp.maximum(t * w3, 0.0)

    # conv4 (1x1, no bias) + sigmoid -> per-channel gate
    g = jax.nn.sigmoid(
        jnp.dot(u, w4t_ref[...], preferred_element_type=jnp.float32))      # (bt, C_in)

    if g.dtype != o_ref.dtype:           # skip the cast when x is already f32
        g = g.astype(o_ref.dtype)
    o_ref[...] = x * g[:, :, None]


def _agca_gate_kernel(x_ref, w1t_ref, a0_ref, a2_ref, w4t_ref, scal_ref,
                      g_ref, acc_ref, *, hw, thw):
    """Two-pass path, pass 1: accumulate the pool over HW tiles, emit gate."""
    h = pl.program_id(1)
    n_h = pl.num_programs(1)

    @pl.when(h == 0)
    def _():
        acc_ref[...] = jnp.zeros_like(acc_ref)

    rem = hw % thw                      # static Python int
    if rem == 0:
        acc_ref[...] += jnp.sum(x_ref[...], axis=-1, dtype=jnp.float32)    # (1, C_in)
    else:
        @pl.when(h < n_h - 1)
        def _():
            acc_ref[...] += jnp.sum(x_ref[...], axis=-1, dtype=jnp.float32)

        @pl.when(h == n_h - 1)
        def _():
            # Ragged tail tile: mask the out-of-bounds lanes so the pool is exact.
            lane = jax.lax.broadcasted_iota(jnp.int32, x_ref.shape, 2)
            xm = jnp.where(lane < rem, x_ref[...], jnp.zeros((), x_ref.dtype))
            acc_ref[...] += jnp.sum(xm, axis=-1, dtype=jnp.float32)

    @pl.when(h == n_h - 1)
    def _():
        w2 = scal_ref[0]
        w3 = scal_ref[1]
        # 1/HW is folded into w1t, so the accumulated sum feeds conv1 directly.
        z = jnp.dot(acc_ref[...], w1t_ref[...],
                    preferred_element_type=jnp.float32)                    # (1, hide)
        logits = z * w2
        m = jnp.max(logits, axis=-1, keepdims=True)
        e = jnp.exp(logits - m)
        s = e / jnp.sum(e, axis=-1, keepdims=True)
        t = s * jnp.dot(z, a0_ref[...], preferred_element_type=jnp.float32) \
            + jnp.dot(z, a2_ref[...], preferred_element_type=jnp.float32)
        u = jnp.maximum(t * w3, 0.0)
        g = jax.nn.sigmoid(
            jnp.dot(u, w4t_ref[...], preferred_element_type=jnp.float32))  # (1, C_in)
        g_ref[0] = g


def _agca_apply_kernel(x_ref, g_ref, o_ref):
    """Two-pass path, pass 2: stream x and apply the per-channel gate."""
    g = g_ref[...]                                   # (1, C_in, 1)
    if g.dtype != o_ref.dtype:
        g = g.astype(o_ref.dtype)
    o_ref[...] = x_ref[...] * g


# ----------------------------------------------------------------------------
# Parameter preparation (one-time; hoists transposes / packs scalars)
# ----------------------------------------------------------------------------
def prepare_agca_params(w1, w2, w3, a0, a2, w4):
    w1t = jnp.asarray(w1, jnp.float32).T            # (C_in, hide)
    w4t = jnp.asarray(w4, jnp.float32).T            # (hide, C_in)
    a0f = jnp.asarray(a0, jnp.float32)              # (hide, hide), used as-is
    a2f = jnp.asarray(a2, jnp.float32)              # (hide, hide), used as-is
    scal = jnp.stack([jnp.asarray(w2, jnp.float32).reshape(()),
                      jnp.asarray(w3, jnp.float32).reshape(())])  # (2,) SMEM scalars
    return w1t, a0f, a2f, w4t, scal


def _round_up(a, m):
    return ((a + m - 1) // m) * m


def _padded_tile_bytes(shape, itemsize=4):
    r, c = shape
    return _round_up(r, 8) * _round_up(c, 128) * itemsize


def _vmem_capacity_bytes():
    """Physical per-core VMEM (64 MiB on v7x, 128 MiB on v5e/v6e)."""
    try:
        info = pltpu.get_tpu_info()
        cap = getattr(info, "vmem_capacity_bytes", None)
        if cap:
            return int(cap)
    except Exception:
        pass
    return 64 << 20   # conservative fallback (works on every generation)


# ----------------------------------------------------------------------------
# Wrapper
# ----------------------------------------------------------------------------
def agca_pallas(x, params, *, block_budget_bytes=None, donate_x=False):
    w1t, a0, a2, w4t, scal = params
    B, C_in, H, W = x.shape
    hide = w1t.shape[1]
    HW = H * W
    inv_hw = 1.0 / HW

    x2 = x.reshape(B, C_in, HW)
    dsize = x2.dtype.itemsize

    # Fold the 1/HW pooling scale into conv1's weight (tiny one-off XLA op):
    # the kernels then consume the raw f32-accumulated spatial sum.
    w1t = w1t * jnp.float32(inv_hw)

    # VMEM accounting (lane dim padded to 128, sublane dim to 8).
    c_pad8 = max(8, _round_up(C_in, 8))
    hw_acc = _round_up(HW, 128)
    slab_bytes = c_pad8 * hw_acc * dsize            # one image worth of x in VMEM

    weights_bytes = 2 * (_padded_tile_bytes(w1t.shape) + _padded_tile_bytes(a0.shape)
                         + _padded_tile_bytes(a2.shape) + _padded_tile_bytes(w4t.shape))

    # Generation-aware budget / clamp.
    vmem_cap = _vmem_capacity_bytes()
    vmem_limit_max = vmem_cap - (8 << 20)           # headroom for Mosaic internals
    derived_budget = max(2 << 20, (vmem_limit_max - weights_bytes - (6 << 20)) // 4)
    if block_budget_bytes is None:
        block_budget_bytes = derived_budget
    else:
        block_budget_bytes = min(block_budget_bytes, derived_budget)

    io_aliases = {0: 0} if donate_x else {}

    weight_specs_1d = [
        pl.BlockSpec((C_in, hide), lambda b: (0, 0)),
        pl.BlockSpec((hide, hide), lambda b: (0, 0)),
        pl.BlockSpec((hide, hide), lambda b: (0, 0)),
        pl.BlockSpec((hide, C_in), lambda b: (0, 0)),
        pl.BlockSpec(memory_space=pltpu.MemorySpace.SMEM),     # [w2, w3] scalars
    ]

    if slab_bytes <= block_budget_bytes:
        # ----------------- fused single-pass path (1 read + 1 write of x) -----
        bt = min(B, max(1, block_budget_bytes // slab_bytes))
        if pl.cdiv(B, bt) < 4:
            # Prefer >=4 grid steps (2 per TC on v7x, deeper DMA pipelining on
            # single-TC chips) as long as per-step blocks stay >= ~2 MiB.
            bt_for_steps = max(1, pl.cdiv(B, 4))
            bt_min_dma = max(1, pl.cdiv(2 << 20, slab_bytes))
            bt = max(1, min(bt, max(bt_for_steps, bt_min_dma)))
        n_b = pl.cdiv(B, bt)                        # ragged last block is fine

        block_bytes = bt * slab_bytes
        vmem_limit = int(min(4 * block_bytes + weights_bytes + (8 << 20),
                             vmem_limit_max))

        cost = pl.CostEstimate(
            flops=int(2 * B * C_in * HW + 4 * B * C_in * hide + 4 * B * hide * hide),
            transcendentals=int(B * (hide + C_in)),
            bytes_accessed=int(2 * B * C_in * HW * dsize + weights_bytes // 2),
        )

        out = pl.pallas_call(
            _agca_fused_kernel,
            out_shape=jax.ShapeDtypeStruct((B, C_in, HW), x2.dtype),
            grid=(n_b,),
            in_specs=[pl.BlockSpec((bt, C_in, HW), lambda b: (b, 0, 0))]
                     + weight_specs_1d,
            out_specs=pl.BlockSpec((bt, C_in, HW), lambda b: (b, 0, 0)),
            input_output_aliases=io_aliases,
            cost_estimate=cost,
            compiler_params=pltpu.CompilerParams(
                dimension_semantics=("parallel",),
                vmem_limit_bytes=vmem_limit),
        )(x2, w1t, a0, a2, w4t, scal)
        return out.reshape(B, C_in, H, W)

    # ----------------- two-pass path for very large single-image slabs -------
    thw = max(128, (block_budget_bytes // (c_pad8 * dsize)) // 128 * 128)
    thw = min(thw, hw_acc)
    n_hw = pl.cdiv(HW, thw)                          # no wrapper-side padding of x
    tile_bytes = c_pad8 * thw * dsize

    weight_specs_2d = [
        pl.BlockSpec((C_in, hide), lambda b, h: (0, 0)),
        pl.BlockSpec((hide, hide), lambda b, h: (0, 0)),
        pl.BlockSpec((hide, hide), lambda b, h: (0, 0)),
        pl.BlockSpec((hide, C_in), lambda b, h: (0, 0)),
        pl.BlockSpec(memory_space=pltpu.MemorySpace.SMEM),
    ]

    gate_cost = pl.CostEstimate(
        flops=int(B * C_in * HW + 4 * B * C_in * hide + 4 * B * hide * hide),
        transcendentals=int(B * (hide + C_in)),
        bytes_accessed=int(B * C_in * HW * dsize + weights_bytes // 2),
    )

    # Pass 1: per-(batch, channel) gate; reduction axis last, tail tile masked.
    g = pl.pallas_call(
        partial(_agca_gate_kernel, hw=HW, thw=thw),
        out_shape=jax.ShapeDtypeStruct((B, 1, C_in), jnp.float32),
        grid=(B, n_hw),
        in_specs=[pl.BlockSpec((1, C_in, thw), lambda b, h: (b, 0, h))]
                 + weight_specs_2d,
        out_specs=pl.BlockSpec((1, 1, C_in), lambda b, h: (b, 0, 0)),
        scratch_shapes=[pltpu.VMEM((1, C_in), jnp.float32)],
        cost_estimate=gate_cost,
        compiler_params=pltpu.CompilerParams(
            dimension_semantics=("parallel", "arbitrary"),
            vmem_limit_bytes=int(min(2 * tile_bytes + weights_bytes + (8 << 20),
                                     vmem_limit_max))),
    )(x2, w1t, a0, a2, w4t, scal)

    g_col = jnp.transpose(g, (0, 2, 1))             # (B, C_in, 1) — tiny, outside kernel

    apply_cost = pl.CostEstimate(
        flops=int(B * C_in * HW),
        transcendentals=0,
        bytes_accessed=int(2 * B * C_in * HW * dsize),
    )

    # Pass 2: re-stream x in lane-dense HW tiles and apply the gate.
    out = pl.pallas_call(
        _agca_apply_kernel,
        out_shape=jax.ShapeDtypeStruct((B, C_in, HW), x2.dtype),
        grid=(B, n_hw),
        in_specs=[
            pl.BlockSpec((1, C_in, thw), lambda b, h: (b, 0, h)),
            pl.BlockSpec((1, C_in, 1), lambda b, h: (b, 0, 0)),
        ],
        out_specs=pl.BlockSpec((1, C_in, thw), lambda b, h: (b, 0, h)),
        input_output_aliases=io_aliases,
        cost_estimate=apply_cost,
        compiler_params=pltpu.CompilerParams(
            dimension_semantics=("parallel", "parallel"),
            vmem_limit_bytes=int(min(4 * tile_bytes + (8 << 20), vmem_limit_max))),
    )(x2, g_col)

    return out.reshape(B, C_in, H, W)


# ----------------------------------------------------------------------------
# Pure-JAX reference mirroring the PyTorch forward
# ----------------------------------------------------------------------------
def agca_ref(x, w1, w2, a0, a2, w3, w4):
    p = jnp.mean(x, axis=(2, 3))                  # avg_pool -> (B, C_in)
    z = p @ w1.T                                  # conv1    -> (B, hide)
    s = jax.nn.softmax(w2 * z, axis=1)            # conv2 + softmax(dim=2)
    t = s * (z @ a0) + (z @ a2)                   # y @ (A0*A1 + A2)
    u = jax.nn.relu(w3 * t)                       # conv3 + relu
    g = jax.nn.sigmoid(u @ w4.T)                  # conv4 + sigmoid -> (B, C_in)
    return x * g[:, :, None, None]


if __name__ == "__main__":
    key = jax.random.PRNGKey(0)

    def make_case(k, B, C_in, H, W, ratio):
        hide = max(1, C_in // ratio)
        ks = jax.random.split(k, 5)
        x = jax.random.normal(ks[0], (B, C_in, H, W), jnp.float32)
        w1 = jax.random.normal(ks[1], (hide, C_in), jnp.float32) * 0.1   # conv1 weight
        w2 = jax.random.normal(ks[2], (), jnp.float32)                   # conv2 scalar
        w3 = jax.random.normal(ks[3], (), jnp.float32)                   # conv3 scalar
        w4 = jax.random.normal(ks[4], (C_in, hide), jnp.float32) * 0.1   # conv4 weight
        a0 = jnp.eye(hide, dtype=jnp.float32)                            # A0 = I
        a2 = jnp.full((hide, hide), 1e-6, dtype=jnp.float32)             # A2 = 1e-6
        return x, (w1, w2, w3, a0, a2, w4)

    keys = jax.random.split(key, 2)

    # Case 1: B=2, C_in=8, 16x16 image (HW is a multiple of 128).
    x, (w1, w2, w3, a0, a2, w4) = make_case(keys[0], 2, 8, 16, 16, 4)
    params = prepare_agca_params(w1, w2, w3, a0, a2, w4)
    ref = agca_ref(x, w1, w2, a0, a2, w3, w4)

    out = agca_pallas(x, params)                                  # fused path
    jax.block_until_ready(out)
    np.testing.assert_allclose(np.asarray(out), np.asarray(ref), rtol=1e-5, atol=1e-5)

    out = agca_pallas(x, params, block_budget_bytes=4096)         # forced two-pass path
    jax.block_until_ready(out)
    np.testing.assert_allclose(np.asarray(out), np.asarray(ref), rtol=1e-5, atol=1e-5)

    # Case 2: B=3, 10x13 image (HW=130, not a multiple of 128) — exercises the
    # unpadded fused path, the ragged cdiv batch grid, and the two-pass path's
    # masked tail HW tile.
    x, (w1, w2, w3, a0, a2, w4) = make_case(keys[1], 3, 8, 10, 13, 4)
    params = prepare_agca_params(w1, w2, w3, a0, a2, w4)
    ref = agca_ref(x, w1, w2, a0, a2, w3, w4)

    out = agca_pallas(x, params)                                  # fused, single block
    jax.block_until_ready(out)
    np.testing.assert_allclose(np.asarray(out), np.asarray(ref), rtol=1e-5, atol=1e-5)

    out = agca_pallas(x, params, block_budget_bytes=2 * 8 * 256 * 4)   # bt=2, ragged grid
    jax.block_until_ready(out)
    np.testing.assert_allclose(np.asarray(out), np.asarray(ref), rtol=1e-5, atol=1e-5)

    out = agca_pallas(x, params, block_budget_bytes=4096)         # two-pass, masked tail
    jax.block_until_ready(out)
    np.testing.assert_allclose(np.asarray(out), np.asarray(ref), rtol=1e-5, atol=1e-5)

    print("KERNEL_OK")
</pallas_src>

<mosaic_0001>
module attributes {stable_mosaic.version = 11 : i64} {
  func.func @_agca_fused_kernel(%arg0: i32, %arg1: memref<2x8x256xf32, #tpu.memory_space<vmem>>, %arg2: memref<8x2xf32, #tpu.memory_space<vmem>>, %arg3: memref<2x2xf32, #tpu.memory_space<vmem>>, %arg4: memref<2x2xf32, #tpu.memory_space<vmem>>, %arg5: memref<2x8xf32, #tpu.memory_space<vmem>>, %arg6: memref<2xf32, #tpu.memory_space<smem>>, %arg7: memref<2x8x256xf32, #tpu.memory_space<vmem>>) attributes {dimension_semantics = [#tpu.dimension_semantics<parallel>], iteration_bounds = array<i64: 1>, scalar_prefetch = 0 : i64, scratch_operands = 0 : i64, tpu.core_type = #tpu.core_type<tc>, window_params = [{transform_indices = @transform_0, window_bounds = array<i64: 2, 8, 256>}, {pipeline_mode = #tpu.pipeline_mode<synchronous>, transform_indices = @transform_1, window_bounds = array<i64: 8, 2>}, {pipeline_mode = #tpu.pipeline_mode<synchronous>, transform_indices = @transform_2, window_bounds = array<i64: 2, 2>}, {pipeline_mode = #tpu.pipeline_mode<synchronous>, transform_indices = @transform_3, window_bounds = array<i64: 2, 2>}, {pipeline_mode = #tpu.pipeline_mode<synchronous>, transform_indices = @transform_4, window_bounds = array<i64: 2, 8>}, {transform_indices = @transform_5, window_bounds = array<i64: 2>}, {transform_indices = @transform_6, window_bounds = array<i64: 2, 8, 256>}]} {
    %c0 = arith.constant 0 : index
    %c0_0 = arith.constant 0 : index
    %c0_1 = arith.constant 0 : index
    %0 = vector.load %arg1[%c0, %c0_0, %c0_1] : memref<2x8x256xf32, #tpu.memory_space<vmem>>, vector<2x8x256xf32>
    %c0_2 = arith.constant 0 : index
    %1 = memref.load %arg6[%c0_2] : memref<2xf32, #tpu.memory_space<smem>>
    %c1 = arith.constant 1 : index
    %2 = memref.load %arg6[%c1] : memref<2xf32, #tpu.memory_space<smem>>
    %cst = arith.constant dense<0.000000e+00> : vector<2x8xf32>
    %3 = vector.multi_reduction <add>, %0, %cst [2] : vector<2x8x256xf32> to vector<2x8xf32>
    %c0_3 = arith.constant 0 : index
    %c0_4 = arith.constant 0 : index
    %4 = vector.load %arg2[%c0_3, %c0_4] : memref<8x2xf32, #tpu.memory_space<vmem>>, vector<8x2xf32>
    %cst_5 = arith.constant dense<0.000000e+00> : vector<2x2xf32>
    %5 = tpu.matmul %3, %4, %cst_5 {dimension_numbers = #tpu.dot_dimension_numbers<[1], [0], [0], [1], [0, 0, 1, 1], [], []>} : vector<2x8xf32>, vector<8x2xf32>, vector<2x2xf32> -> vector<2x2xf32>
    %6 = vector.broadcast %1 : f32 to vector<2x2xf32>
    %7 = arith.mulf %5, %6 : vector<2x2xf32>
    %cst_6 = arith.constant dense<0xFF800000> : vector<2xf32>
    %8 = vector.multi_reduction <maximumf>, %7, %cst_6 [1] : vector<2x2xf32> to vector<2xf32>
    %9 = vector.shape_cast %8 : vector<2xf32> to vector<2x1xf32>
    %10 = vector.broadcast %9 : vector<2x1xf32> to vector<2x2xf32>
    %11 = arith.subf %7, %10 : vector<2x2xf32>
    %12 = math.exp %11 : vector<2x2xf32>
    %cst_7 = arith.constant dense<0.000000e+00> : vector<2xf32>
    %13 = vector.multi_reduction <add>, %12, %cst_7 [1] : vector<2x2xf32> to vector<2xf32>
    %14 = vector.shape_cast %13 : vector<2xf32> to vector<2x1xf32>
    %15 = vector.broadcast %14 : vector<2x1xf32> to vector<2x2xf32>
    %16 = arith.divf %12, %15 : vector<2x2xf32>
    %c0_8 = arith.constant 0 : index
    %c0_9 = arith.constant 0 : index
    %17 = vector.load %arg3[%c0_8, %c0_9] : memref<2x2xf32, #tpu.memory_space<vmem>>, vector<2x2xf32>
    %cst_10 = arith.constant dense<0.000000e+00> : vector<2x2xf32>
    %18 = tpu.matmul %5, %17, %cst_10 {dimension_numbers = #tpu.dot_dimension_numbers<[1], [0], [0], [1], [0, 0, 1, 1], [], []>} : vector<2x2xf32>, vector<2x2xf32>, vector<2x2xf32> -> vector<2x2xf32>
    %19 = arith.mulf %16, %18 : vector<2x2xf32>
    %c0_11 = arith.constant 0 : index
    %c0_12 = arith.constant 0 : index
    %20 = vector.load %arg4[%c0_11, %c0_12] : memref<2x2xf32, #tpu.memory_space<vmem>>, vector<2x2xf32>
    %cst_13 = arith.constant dense<0.000000e+00> : vector<2x2xf32>
    %21 = tpu.matmul %5, %20, %cst_13 {dimension_numbers = #tpu.dot_dimension_numbers<[1], [0], [0], [1], [0, 0, 1, 1], [], []>} : vector<2x2xf32>, vector<2x2xf32>, vector<2x2xf32> -> vector<2x2xf32>
    %22 = arith.addf %19, %21 : vector<2x2xf32>
    %23 = vector.broadcast %2 : f32 to vector<2x2xf32>
    %24 = arith.mulf %22, %23 : vector<2x2xf32>
    %cst_14 = arith.constant 0.000000e+00 : f32
    %25 = vector.broadcast %cst_14 : f32 to vector<2x2xf32>
    %26 = arith.maximumf %24, %25 : vector<2x2xf32>
    %c0_15 = arith.constant 0 : index
    %c0_16 = arith.constant 0 : index
    %27 = vector.load %arg5[%c0_15, %c0_16] : memref<2x8xf32, #tpu.memory_space<vmem>>, vector<2x8xf32>
    %cst_17 = arith.constant dense<0.000000e+00> : vector<2x8xf32>
    %28 = tpu.matmul %26, %27, %cst_17 {dimension_numbers = #tpu.dot_dimension_numbers<[1], [0], [0], [1], [0, 0, 1, 1], [], []>} : vector<2x2xf32>, vector<2x8xf32>, vector<2x8xf32> -> vector<2x8xf32>
    %29 = arith.negf %28 : vector<2x8xf32>
    %30 = math.exp %29 : vector<2x8xf32>
    %cst_18 = arith.constant 1.000000e+00 : f32
    %31 = vector.broadcast %cst_18 : f32 to vector<2x8xf32>
    %32 = arith.addf %31, %30 : vector<2x8xf32>
    %33 = arith.divf %31, %32 : vector<2x8xf32>
    %34 = vector.shape_cast %33 : vector<2x8xf32> to vector<2x8x1xf32>
    %35 = vector.broadcast %34 : vector<2x8x1xf32> to vector<2x8x256xf32>
    %36 = arith.mulf %0, %35 : vector<2x8x256xf32>
    %c0_19 = arith.constant 0 : index
    %c0_20 = arith.constant 0 : index
    %c0_21 = arith.constant 0 : index
    %37 = vector.load %arg7[%c0_19, %c0_20, %c0_21] : memref<2x8x256xf32, #tpu.memory_space<vmem>>, vector<2x8x256xf32>
    tpu.vector_store %arg7[%c0_19, %c0_20, %c0_21], %36 {strides = array<i32>} : memref<2x8x256xf32, #tpu.memory_space<vmem>>, vector<2x8x256xf32>,
    return
  }
  func.func @transform_0(%arg0: i32) -> (i32, i32, i32) {
    %c0_i32 = arith.constant 0 : i32
    %c0_i32_0 = arith.constant 0 : i32
    %c0_i32_1 = arith.constant 0 : i32
    return %arg0, %c0_i32, %c0_i32_0 : i32, i32, i32
  }
  func.func @transform_1(%arg0: i32) -> (i32, i32) {
    %c0_i32 = arith.constant 0 : i32
    %c0_i32_0 = arith.constant 0 : i32
    %c0_i32_1 = arith.constant 0 : i32
    return %c0_i32, %c0_i32_0 : i32, i32
  }
  func.func @transform_2(%arg0: i32) -> (i32, i32) {
    %c0_i32 = arith.constant 0 : i32
    %c0_i32_0 = arith.constant 0 : i32
    %c0_i32_1 = arith.constant 0 : i32
    return %c0_i32, %c0_i32_0 : i32, i32
  }
  func.func @transform_3(%arg0: i32) -> (i32, i32) {
    %c0_i32 = arith.constant 0 : i32
    %c0_i32_0 = arith.constant 0 : i32
    %c0_i32_1 = arith.constant 0 : i32
    return %c0_i32, %c0_i32_0 : i32, i32
  }
  func.func @transform_4(%arg0: i32) -> (i32, i32) {
    %c0_i32 = arith.constant 0 : i32
    %c0_i32_0 = arith.constant 0 : i32
    %c0_i32_1 = arith.constant 0 : i32
    return %c0_i32, %c0_i32_0 : i32, i32
  }
  func.func @transform_5(%arg0: i32) -> i32 {
    %c0_i32 = arith.constant 0 : i32
    %c0_i32_0 = arith.constant 0 : i32
    return %c0_i32 : i32
  }
  func.func @transform_6(%arg0: i32) -> (i32, i32, i32) {
    %c0_i32 = arith.constant 0 : i32
    %c0_i32_0 = arith.constant 0 : i32
    %c0_i32_1 = arith.constant 0 : i32
    return %arg0, %c0_i32, %c0_i32_0 : i32, i32, i32
  }
}

</mosaic_0001>

<llo_original>
// kernel: tpu_custom_call.1
$region0: #{tpu_custom_call.1}
  #allocation0 [shape = 'u32[]', space=smem, size = 0x4, offset = 0x4, fixed_abs, tag = 'smem constant byte address 0x4 - core index']
  #allocation1 [shape = 'u32[144,128]{1,0:T(1,128)}', space=vmem, size = 0x12000, scoped, tag = 'internal scratch']
  %s0 = inlined_call_operand.hbm [shape: f32[2,8,256], index: 0, kind: input, shape index: {}]
  %s1 = inlined_call_operand.vmem [shape: f32[8,2], index: 1, kind: input, shape index: {}]
  %s2 = inlined_call_operand.vmem [shape: f32[2,2], index: 2, kind: input, shape index: {}]
  %s3 = inlined_call_operand.vmem [shape: f32[2,2], index: 3, kind: input, shape index: {}]
  %s4 = inlined_call_operand.vmem [shape: f32[2,8], index: 4, kind: input, shape index: {}]
  %s5 = inlined_call_operand.vmem [shape: f32[2], index: 5, kind: input, shape index: {}]
  %s6 = inlined_call_operand.hbm [shape: f32[2,8,256], index: 6, kind: output, shape index: {}]
  %s7 = sld [smem:[#allocation0]]
  $region42: #{tpu_custom_call.1} parent=0
    _
  %s9 = ssub.s32 1, %s7
  %s10 = scalar_select 0, %s9, %s7
  $region1: #{tpu_custom_call.1} parent=0
    #allocation2 [shape = 'u8[16384]{0}', space=vmem, size = 0x4000, scoped, tag = 'input window, operand 0, single buffered']
    #allocation3 [shape = 's32[1]{0}', space=sflag, size = 0x4, scoped, tag = 'scoped memory for tpu_custom_call.1']
    #allocation4 [shape = 's32[1]{0}', space=sflag, size = 0x4, scoped, tag = 'scoped memory for tpu_custom_call.1']
    #allocation5 [shape = 's32[1]{0}', space=sflag, size = 0x4, scoped, tag = 'scoped memory for tpu_custom_call.1']
    #allocation6 [shape = 'u8[512]{0}', space=smem, size = 0x200, scoped, tag = 'input window, operand 5, single buffered']
    #allocation7 [shape = 'u8[16384]{0}', space=vmem, size = 0x4000, scoped, tag = 'output window, operand 0, single buffered']
    %11 = vsyncpa [#allocation3], 0
    %12 = vsyncpa [#allocation5], 0
    %13 = vsyncpa [#allocation4], 0
    // Predicated region
    $region2: #{tpu_custom_call.1} parent=1 // pred_check
      _
    $region3: #{tpu_custom_call.1} parent=1 // pred_check_branch
      %15 = sbr.rel (0) target = $region5
    $region4: #{tpu_custom_call.1} parent=1 // pred_region
      %s17 = ssub.s32 512, 512
      %18 = vsyncadd [#allocation3], %s17
      %s19 = sshll.u32 [#allocation2], 4
      %s20 = int_to_ptr.vmem [resolvable:$true] %s19
      %25 = dma.hbm_to_vmem [thread:$0]  %s0, 512, %s20, [#allocation3], 256, 256, 16
    $region5: #{tpu_custom_call.1} parent=1 // pred_fallthru
      _
    // Predicated region
    $region6: #{tpu_custom_call.1} parent=1 // pred_check
      _
    $region7: #{tpu_custom_call.1} parent=1 // pred_check_branch
      %27 = sbr.rel (0) target = $region9
    $region8: #{tpu_custom_call.1} parent=1 // pred_region
      _
    $region9: #{tpu_custom_call.1} parent=1 // pred_fallthru
      _
    // Predicated region
    $region10: #{tpu_custom_call.1} parent=1 // pred_check
      _
    $region11: #{tpu_custom_call.1} parent=1 // pred_check_branch
      %29 = sbr.rel (0) target = $region13
    $region12: #{tpu_custom_call.1} parent=1 // pred_region
      _
    $region13: #{tpu_custom_call.1} parent=1 // pred_fallthru
      _
    // Predicated region
    $region14: #{tpu_custom_call.1} parent=1 // pred_check
      _
    $region15: #{tpu_custom_call.1} parent=1 // pred_check_branch
      %31 = sbr.rel (0) target = $region17
    $region16: #{tpu_custom_call.1} parent=1 // pred_region
      _
    $region17: #{tpu_custom_call.1} parent=1 // pred_fallthru
      _
    // Predicated region
    $region18: #{tpu_custom_call.1} parent=1 // pred_check
      _
    $region19: #{tpu_custom_call.1} parent=1 // pred_check_branch
      %33 = sbr.rel (0) target = $region21
    $region20: #{tpu_custom_call.1} parent=1 // pred_region
      _
    $region21: #{tpu_custom_call.1} parent=1 // pred_fallthru
      _
    // Predicated region
    $region22: #{tpu_custom_call.1} parent=1 // pred_check
      _
    $region23: #{tpu_custom_call.1} parent=1 // pred_check_branch
      %35 = sbr.rel (0) target = $region25
    $region24: #{tpu_custom_call.1} parent=1 // pred_region
      %s37 = ssub.s32 16, 16
      %38 = vsyncadd [#allocation5], %s37
      %s40 = sshll.u32 %s5, 4
      %s41 = int_to_ptr.vmem [resolvable:$true] %s40
      %43 = dma.vmem_to_smem %s41, 16, [#allocation6], [#allocation5]
    $region25: #{tpu_custom_call.1} parent=1 // pred_fallthru
      _
    // Predicated region
    $region26: #{tpu_custom_call.1} parent=1 // pred_check
      _
    $region27: #{tpu_custom_call.1} parent=1 // pred_check_branch
      %45 = sbr.rel (0) target = $region29
    $region28: #{tpu_custom_call.1} parent=1 // pred_region
      %46 = dma.done [#allocation3], 512
    $region29: #{tpu_custom_call.1} parent=1 // pred_fallthru
      _
    // Predicated region
    $region30: #{tpu_custom_call.1} parent=1 // pred_check
      _
    $region31: #{tpu_custom_call.1} parent=1 // pred_check_branch
      %48 = sbr.rel (0) target = $region33
    $region32: #{tpu_custom_call.1} parent=1 // pred_region
      %49 = dma.done [#allocation5], 16
    $region33: #{tpu_custom_call.1} parent=1 // pred_fallthru
      _
    %50 = sfence
    %v51 = vld [vmem:[#allocation2] sm:$0xff]
    %v52 = vld [vmem:[#allocation2 + $0x8] sm:$0xff]
    %v53 = vld [vmem:[#allocation2 + $0x10] sm:$0xff]
    %v54 = vld [vmem:[#allocation2 + $0x18] sm:$0xff]
    %s55 = sld [smem:[#allocation6]]
    %s56 = sld [smem:[#allocation6 + $0x1]]
    %v57 = vadd.f32 %v51, %v52
    %58 = vadd.xlane.f32.xlu0 %v57
    %v59 = vpop.xlane.xlu0 %58
    %v60 = vadd.f32 %v53, %v54
    %61 = vadd.xlane.f32.xlu0 %v60
    %v62 = vpop.xlane.xlu0 %61
    %v63 = vld [vmem:[%s1] sm:$0xff]
    %v66 = vlaneseq
    %v67 = vand.u32 %v66, 127
    %v68 = vlaneseq
    %v69 = vshrl.u32 %v68, 7
    %v70 = vsub.s32 %v67, %v69
    %v71 = vrot.slane %v59, %v70
    %v72 = vlaneseq
    %v73 = vshrl.u32 %v72, 7
    %v74 = vsub.s32 %v67, %v73
    %v75 = vrot.slane %v62, %v74
    %vm76 = vcmask 1041409
    %v77 = vsel %vm76, %v75, %v71
    %vm78 = vcmask 64512
    %v79 = vsel %vm78, %v77, 0
    %81 = vmatprep.subr.mxu0 0.0
    %82 = vmatpush1.msra.mxu0 %v63
    %83 = vmatprep.subr.mxu0 0.0
    %84 = vmatpush1.msra.mxu0 0.0
    %85 = vmatprep.subr.mxu0 0.0
    %86 = vmatpush1.msra.mxu0 0.0
    %87 = vmatprep.subr.mxu0 0.0
    %88 = vmatpush1.msra.mxu0 0.0
    %89 = vmatprep.subr.mxu0 0.0
    %90 = vmatpush1.msra.mxu0 0.0
    %91 = vmatprep.subr.mxu0 0.0
    %92 = vmatpush1.msra.mxu0 0.0
    %93 = vmatprep.subr.mxu0 0.0
    %94 = vmatpush1.msra.mxu0 0.0
    %95 = vmatprep.subr.mxu0 0.0
    %96 = vmatpush1.msra.mxu0 0.0
    %97 = vmatprep.subr.mxu0 0.0
    %98 = vmatpush1.msra.mxu0 0.0
    %99 = vmatprep.subr.mxu0 0.0
    %100 = vmatpush1.msra.mxu0 0.0
    %101 = vmatprep.subr.mxu0 0.0
    %102 = vmatpush1.msra.mxu0 0.0
    %103 = vmatprep.subr.mxu0 0.0
    %104 = vmatpush1.msra.mxu0 0.0
    %105 = vmatprep.subr.mxu0 0.0
    %106 = vmatpush1.msra.mxu0 0.0
    %107 = vmatprep.subr.mxu0 0.0
    %108 = vmatpush1.msra.mxu0 0.0
    %109 = vmatprep.subr.mxu0 0.0
    %110 = vmatpush1.msra.mxu0 0.0
    %111 = vmatprep.subr.mxu0 0.0
    %112 = vmatpush1.msra.mxu0 0.0
    %113 = vmatprep.subr.mxu0 0.0
    %114 = vmatpush1.msra.mxu0 0.0
    %115 = vmatprep.subr.mxu0 0.0
    %116 = vmatpush1.msra.mxu0 0.0
    %117 = vmatprep.subr.mxu0 0.0
    %118 = vmatpush1.msra.mxu0 0.0
    %119 = vmatprep.subr.mxu0 0.0
    %120 = vmatpush1.msra.mxu0 0.0
    %121 = vmatprep.subr.mxu0 0.0
    %122 = vmatpush1.msra.mxu0 0.0
    %123 = vmatprep.subr.mxu0 0.0
    %124 = vmatpush1.msra.mxu0 0.0
    %125 = vmatprep.subr.mxu0 0.0
    %126 = vmatpush1.msra.mxu0 0.0
    %127 = vmatprep.subr.mxu0 0.0
    %128 = vmatpush1.msra.mxu0 0.0
    %129 = vmatprep.subr.mxu0 0.0
    %130 = vmatpush1.msra.mxu0 0.0
    %131 = vmatprep.subr.mxu0 0.0
    %132 = vmatpush1.msra.mxu0 0.0
    %133 = vmatprep.subr.mxu0 0.0
    %134 = vmatpush1.msra.mxu0 0.0
    %135 = vmatprep.subr.mxu0 0.0
    %136 = vmatpush1.msra.mxu0 0.0
    %137 = vmatprep.subr.mxu0 0.0
    %138 = vmatpush1.msra.mxu0 0.0
    %139 = vmatprep.subr.mxu0 0.0
    %140 = vmatpush1.msra.mxu0 0.0
    %141 = vmatprep.subr.mxu0 0.0
    %142 = vmatpush1.msra.mxu0 0.0
    %143 = vmatprep.subr.mxu0 0.0
    %144 = vmatpush1.msra.mxu0 0.0
    %145 = vmatprep.mubr.f32.mxu0 0.0
    %146 = vmatmul.mubr.f32.gmra.mrb[0].mxu0 %v79
    %v147 = vpop.f32.mrb[0].mxu0
    %v148 = vadd.f32 0.0, %v147
    %v149 = vpop.f32.mrb[0].mxu0
    %150 = vdwg.mxu0
    %v151 = vstv %s55
    %v152 = vmul.f32 %v148, %v151
    %vm153 = vcmask 9216
    %v154 = vsel %vm153, %v152, -inf
    %155 = vmax.xlane.f32.xlu0 %v154
    %v156 = vpop.xlane.xlu0 %155
    %v157 = vsub.f32 %v152, %v156
    %v158 = vmul.f32 %v157, 1.442695
    %v159 = vpow.pop %v158
    %v160 = vsel %vm153, %v159, 0.0
    %161 = vadd.xlane.f32.xlu0 %v160
    %v162 = vpop.xlane.xlu0 %161
    %v163 = vrcp.pop %v162
    %v164 = vmul.f32 %v159, %v163
    %v165 = vld [vmem:[%s2] sm:$0x3]
    %vm166 = vcmask 15360
    %v168 = vsel %vm166, %v148, 0
    %vm170 = vcmask 1041408
    %v172 = vsel %vm170, %v165, 0
    %174 = vmatprep.subr.mxu0 0.0
    %175 = vmatpush1.msra.mxu0 %v172
    %176 = vmatprep.subr.mxu0 0.0
    %177 = vmatpush1.msra.mxu0 0.0
    %178 = vmatprep.subr.mxu0 0.0
    %179 = vmatpush1.msra.mxu0 0.0
    %180 = vmatprep.subr.mxu0 0.0
    %181 = vmatpush1.msra.mxu0 0.0
    %182 = vmatprep.subr.mxu0 0.0
    %183 = vmatpush1.msra.mxu0 0.0
    %184 = vmatprep.subr.mxu0 0.0
    %185 = vmatpush1.msra.mxu0 0.0
    %186 = vmatprep.subr.mxu0 0.0
    %187 = vmatpush1.msra.mxu0 0.0
    %188 = vmatprep.subr.mxu0 0.0
    %189 = vmatpush1.msra.mxu0 0.0
    %190 = vmatprep.subr.mxu0 0.0
    %191 = vmatpush1.msra.mxu0 0.0
    %192 = vmatprep.subr.mxu0 0.0
    %193 = vmatpush1.msra.mxu0 0.0
    %194 = vmatprep.subr.mxu0 0.0
    %195 = vmatpush1.msra.mxu0 0.0
    %196 = vmatprep.subr.mxu0 0.0
    %197 = vmatpush1.msra.mxu0 0.0
    %198 = vmatprep.subr.mxu0 0.0
    %199 = vmatpush1.msra.mxu0 0.0
    %200 = vmatprep.subr.mxu0 0.0
    %201 = vmatpush1.msra.mxu0 0.0
    %202 = vmatprep.subr.mxu0 0.0
    %203 = vmatpush1.msra.mxu0 0.0
    %204 = vmatprep.subr.mxu0 0.0
    %205 = vmatpush1.msra.mxu0 0.0
    %206 = vmatprep.subr.mxu0 0.0
    %207 = vmatpush1.msra.mxu0 0.0
    %208 = vmatprep.subr.mxu0 0.0
    %209 = vmatpush1.msra.mxu0 0.0
    %210 = vmatprep.subr.mxu0 0.0
    %211 = vmatpush1.msra.mxu0 0.0
    %212 = vmatprep.subr.mxu0 0.0
    %213 = vmatpush1.msra.mxu0 0.0
    %214 = vmatprep.subr.mxu0 0.0
    %215 = vmatpush1.msra.mxu0 0.0
    %216 = vmatprep.subr.mxu0 0.0
    %217 = vmatpush1.msra.mxu0 0.0
    %218 = vmatprep.subr.mxu0 0.0
    %219 = vmatpush1.msra.mxu0 0.0
    %220 = vmatprep.subr.mxu0 0.0
    %221 = vmatpush1.msra.mxu0 0.0
    %222 = vmatprep.subr.mxu0 0.0
    %223 = vmatpush1.msra.mxu0 0.0
    %224 = vmatprep.subr.mxu0 0.0
    %225 = vmatpush1.msra.mxu0 0.0
    %226 = vmatprep.subr.mxu0 0.0
    %227 = vmatpush1.msra.mxu0 0.0
    %228 = vmatprep.subr.mxu0 0.0
    %229 = vmatpush1.msra.mxu0 0.0
    %230 = vmatprep.subr.mxu0 0.0
    %231 = vmatpush1.msra.mxu0 0.0
    %232 = vmatprep.subr.mxu0 0.0
    %233 = vmatpush1.msra.mxu0 0.0
    %234 = vmatprep.subr.mxu0 0.0
    %235 = vmatpush1.msra.mxu0 0.0
    %236 = vmatprep.subr.mxu0 0.0
    %237 = vmatpush1.msra.mxu0 0.0
    %238 = vmatprep.mubr.f32.mxu0 0.0
    %239 = vmatmul.mubr.f32.gmra.mrb[0].mxu0 %v168
    %v240 = vpop.f32.mrb[0].mxu0
    %v241 = vadd.f32 0.0, %v240
    %v242 = vpop.f32.mrb[0].mxu0
    %243 = vdwg.mxu0
    %v244 = vmul.f32 %v164, %v241
    %v245 = vld [vmem:[%s3] sm:$0x3]
    %v247 = vsel %vm170, %v245, 0
    %249 = vmatprep.subr.mxu0 0.0
    %250 = vmatpush1.msra.mxu0 %v247
    %251 = vmatprep.subr.mxu0 0.0
    %252 = vmatpush1.msra.mxu0 0.0
    %253 = vmatprep.subr.mxu0 0.0
    %254 = vmatpush1.msra.mxu0 0.0
    %255 = vmatprep.subr.mxu0 0.0
    %256 = vmatpush1.msra.mxu0 0.0
    %257 = vmatprep.subr.mxu0 0.0
    %258 = vmatpush1.msra.mxu0 0.0
    %259 = vmatprep.subr.mxu0 0.0
    %260 = vmatpush1.msra.mxu0 0.0
    %261 = vmatprep.subr.mxu0 0.0
    %262 = vmatpush1.msra.mxu0 0.0
    %263 = vmatprep.subr.mxu0 0.0
    %264 = vmatpush1.msra.mxu0 0.0
    %265 = vmatprep.subr.mxu0 0.0
    %266 = vmatpush1.msra.mxu0 0.0
    %267 = vmatprep.subr.mxu0 0.0
    %268 = vmatpush1.msra.mxu0 0.0
    %269 = vmatprep.subr.mxu0 0.0
    %270 = vmatpush1.msra.mxu0 0.0
    %271 = vmatprep.subr.mxu0 0.0
    %272 = vmatpush1.msra.mxu0 0.0
    %273 = vmatprep.subr.mxu0 0.0
    %274 = vmatpush1.msra.mxu0 0.0
    %275 = vmatprep.subr.mxu0 0.0
    %276 = vmatpush1.msra.mxu0 0.0
    %277 = vmatprep.subr.mxu0 0.0
    %278 = vmatpush1.msra.mxu0 0.0
    %279 = vmatprep.subr.mxu0 0.0
    %280 = vmatpush1.msra.mxu0 0.0
    %281 = vmatprep.subr.mxu0 0.0
    %282 = vmatpush1.msra.mxu0 0.0
    %283 = vmatprep.subr.mxu0 0.0
    %284 = vmatpush1.msra.mxu0 0.0
    %285 = vmatprep.subr.mxu0 0.0
    %286 = vmatpush1.msra.mxu0 0.0
    %287 = vmatprep.subr.mxu0 0.0
    %288 = vmatpush1.msra.mxu0 0.0
    %289 = vmatprep.subr.mxu0 0.0
    %290 = vmatpush1.msra.mxu0 0.0
    %291 = vmatprep.subr.mxu0 0.0
    %292 = vmatpush1.msra.mxu0 0.0
    %293 = vmatprep.subr.mxu0 0.0
    %294 = vmatpush1.msra.mxu0 0.0
    %295 = vmatprep.subr.mxu0 0.0
    %296 = vmatpush1.msra.mxu0 0.0
    %297 = vmatprep.subr.mxu0 0.0
    %298 = vmatpush1.msra.mxu0 0.0
    %299 = vmatprep.subr.mxu0 0.0
    %300 = vmatpush1.msra.mxu0 0.0
    %301 = vmatprep.subr.mxu0 0.0
    %302 = vmatpush1.msra.mxu0 0.0
    %303 = vmatprep.subr.mxu0 0.0
    %304 = vmatpush1.msra.mxu0 0.0
    %305 = vmatprep.subr.mxu0 0.0
    %306 = vmatpush1.msra.mxu0 0.0
    %307 = vmatprep.subr.mxu0 0.0
    %308 = vmatpush1.msra.mxu0 0.0
    %309 = vmatprep.subr.mxu0 0.0
    %310 = vmatpush1.msra.mxu0 0.0
    %311 = vmatprep.subr.mxu0 0.0
    %312 = vmatpush1.msra.mxu0 0.0
    %313 = vmatprep.mubr.f32.mxu0 0.0
    %314 = vmatmul.mubr.f32.gmra.mrb[0].mxu0 %v168
    %v315 = vpop.f32.mrb[0].mxu0
    %v316 = vadd.f32 0.0, %v315
    %v317 = vpop.f32.mrb[0].mxu0
    %318 = vdwg.mxu0
    %v319 = vadd.f32 %v244, %v316
    %v320 = vstv %s56
    %v321 = vmul.f32 %v319, %v320
    %v322 = vmax.f32 %v321, 0.0
    %v323 = vld [vmem:[%s4] sm:$0x3]
    %v325 = vsel %vm166, %v322, 0
    %v328 = vsel %vm170, %v323, 0
    %330 = vmatprep.subr.mxu0 0.0
    %331 = vmatpush1.msra.mxu0 %v328
    %332 = vmatprep.subr.mxu0 0.0
    %333 = vmatpush1.msra.mxu0 0.0
    %334 = vmatprep.subr.mxu0 0.0
    %335 = vmatpush1.msra.mxu0 0.0
    %336 = vmatprep.subr.mxu0 0.0
    %337 = vmatpush1.msra.mxu0 0.0
    %338 = vmatprep.subr.mxu0 0.0
    %339 = vmatpush1.msra.mxu0 0.0
    %340 = vmatprep.subr.mxu0 0.0
    %341 = vmatpush1.msra.mxu0 0.0
    %342 = vmatprep.subr.mxu0 0.0
    %343 = vmatpush1.msra.mxu0 0.0
    %344 = vmatprep.subr.mxu0 0.0
    %345 = vmatpush1.msra.mxu0 0.0
    %346 = vmatprep.subr.mxu0 0.0
    %347 = vmatpush1.msra.mxu0 0.0
    %348 = vmatprep.subr.mxu0 0.0
    %349 = vmatpush1.msra.mxu0 0.0
    %350 = vmatprep.subr.mxu0 0.0
    %351 = vmatpush1.msra.mxu0 0.0
    %352 = vmatprep.subr.mxu0 0.0
    %353 = vmatpush1.msra.mxu0 0.0
    %354 = vmatprep.subr.mxu0 0.0
    %355 = vmatpush1.msra.mxu0 0.0
    %356 = vmatprep.subr.mxu0 0.0
    %357 = vmatpush1.msra.mxu0 0.0
    %358 = vmatprep.subr.mxu0 0.0
    %359 = vmatpush1.msra.mxu0 0.0
    %360 = vmatprep.subr.mxu0 0.0
    %361 = vmatpush1.msra.mxu0 0.0
    %362 = vmatprep.subr.mxu0 0.0
    %363 = vmatpush1.msra.mxu0 0.0
    %364 = vmatprep.subr.mxu0 0.0
    %365 = vmatpush1.msra.mxu0 0.0
    %366 = vmatprep.subr.mxu0 0.0
    %367 = vmatpush1.msra.mxu0 0.0
    %368 = vmatprep.subr.mxu0 0.0
    %369 = vmatpush1.msra.mxu0 0.0
    %370 = vmatprep.subr.mxu0 0.0
    %371 = vmatpush1.msra.mxu0 0.0
    %372 = vmatprep.subr.mxu0 0.0
    %373 = vmatpush1.msra.mxu0 0.0
    %374 = vmatprep.subr.mxu0 0.0
    %375 = vmatpush1.msra.mxu0 0.0
    %376 = vmatprep.subr.mxu0 0.0
    %377 = vmatpush1.msra.mxu0 0.0
    %378 = vmatprep.subr.mxu0 0.0
    %379 = vmatpush1.msra.mxu0 0.0
    %380 = vmatprep.subr.mxu0 0.0
    %381 = vmatpush1.msra.mxu0 0.0
    %382 = vmatprep.subr.mxu0 0.0
    %383 = vmatpush1.msra.mxu0 0.0
    %384 = vmatprep.subr.mxu0 0.0
    %385 = vmatpush1.msra.mxu0 0.0
    %386 = vmatprep.subr.mxu0 0.0
    %387 = vmatpush1.msra.mxu0 0.0
    %388 = vmatprep.subr.mxu0 0.0
    %389 = vmatpush1.msra.mxu0 0.0
    %390 = vmatprep.subr.mxu0 0.0
    %391 = vmatpush1.msra.mxu0 0.0
    %392 = vmatprep.subr.mxu0 0.0
    %393 = vmatpush1.msra.mxu0 0.0
    %394 = vmatprep.mubr.f32.mxu0 0.0
    %395 = vmatmul.mubr.f32.gmra.mrb[0].mxu0 %v325
    %v396 = vpop.f32.mrb[0].mxu0
    %v397 = vadd.f32 0.0, %v396
    %v398 = vpop.f32.mrb[0].mxu0
    %399 = vdwg.mxu0
    %v400 = vxor.u32 %v397, 2147483648
    %v401 = vmul.f32 %v400, 1.442695
    %v402 = vpow.pop %v401
    %v403 = vadd.f32 %v402, 1.0
    %v404 = vrcp.pop %v403
    %v405 = vmul.f32 1.0, %v404
    %v406 = vlaneseq
    %v407 = vshrl.u32 %v406, 7
    %v408 = vsub.s32 0, %v407
    %v409 = vrot.slane %v405, %v408
    %411 = vbcast.lane.b32.xlu0 %v409, 256
    %v412 = vpop.permute.xlu0 %411
    %v413 = vlaneseq
    %v414 = vshrl.u32 %v413, 7
    %v415 = vsub.s32 1, %v414
    %v416 = vrot.slane %v405, %v415
    %418 = vbcast.lane.b32.xlu0 %v416, 256
    %v419 = vpop.permute.xlu0 %418
    %v420 = vmul.f32 %v51, %v412
    %v421 = vmul.f32 %v52, %v412
    %v422 = vmul.f32 %v53, %v419
    %v423 = vmul.f32 %v54, %v419
    %424 = vst [vmem:[#allocation7] sm:$0xff] %v420
    %425 = vst [vmem:[#allocation7 + $0x8] sm:$0xff] %v421
    %426 = vst [vmem:[#allocation7 + $0x10] sm:$0xff] %v422
    %427 = vst [vmem:[#allocation7 + $0x18] sm:$0xff] %v423
    // Predicated region
    $region34: #{tpu_custom_call.1} parent=1 // pred_check
      _
    $region35: #{tpu_custom_call.1} parent=1 // pred_check_branch
      %429 = sbr.rel (0) target = $region37
    $region36: #{tpu_custom_call.1} parent=1 // pred_region
      %s431 = ssub.s32 512, 512
      %432 = vsyncadd [#allocation4], %s431
      %s433 = sshll.u32 [#allocation7], 4
      %s434 = int_to_ptr.vmem [resolvable:$true] %s433
      %439 = dma.vmem_to_hbm [thread:$0]  %s434, 512, %s6, [#allocation4], 256, 256, 16
    $region37: #{tpu_custom_call.1} parent=1 // pred_fallthru
      _
    // Predicated region
    $region38: #{tpu_custom_call.1} parent=1 // pred_check
      _
    $region39: #{tpu_custom_call.1} parent=1 // pred_check_branch
      %441 = sbr.rel (0) target = $region41
    $region40: #{tpu_custom_call.1} parent=1 // pred_region
      %442 = dma.done [#allocation4], 512
    $region41: #{tpu_custom_call.1} parent=1 // pred_fallthru
      _
    %443 = vsyncpa [#allocation3], 1
    %444 = vsyncpa [#allocation4], 1
    %445 = vsyncpa [#allocation5], 1

</llo_original>
